<compile_context>
chip_gen: v6e
topology: v6e:2x2x1
jax: 0.10.0
libtpu: 0.0.40
codegen_flags: <defaults>
</compile_context>

<pallas_src>
import jax
import jax.numpy as jnp
from jax.experimental import pallas as pl
from jax.experimental.pallas import tpu as pltpu


def _copy_kernel(x_ref, o_ref):
    # The entire "forward" of Transfer: y = x.
    o_ref[...] = x_ref[...]


_LANE_WIDTHS = (4096, 2048, 1024, 512, 256, 128)
_TARGET_BLOCK_BYTES = 4 * 1024 * 1024     # ~4 MiB/block -> ~16 MiB double-buffered (in+out)
_VMEM_LIMIT_BYTES = 48 * 1024 * 1024      # headroom even on v7x (64 MiB physical VMEM)


def _sublane_multiple(dtype):
    itemsize = jnp.dtype(dtype).itemsize
    return {4: 8, 2: 16, 1: 32}.get(itemsize, 8)


def transfer_forward(x):
    """Identity forward pass (Transfer.forward) as a Pallas TPU kernel."""
    orig_shape = x.shape
    n = x.size
    if n == 0:
        return x

    itemsize = jnp.dtype(x.dtype).itemsize
    sublane = _sublane_multiple(x.dtype)

    # Lane-dense 2D view: last dim is the largest multiple of 128 dividing n.
    cols = next((c for c in _LANE_WIDTHS if n % c == 0), None)
    if cols is None:
        # Awkward size: pad the flat view to a multiple of 128 lanes, copy,
        # then slice back. (Identity semantics are preserved exactly.)
        pad = (-n) % 128
        flat = jnp.pad(x.reshape(-1), (0, pad))
        cols = 128
        rows = (n + pad) // cols
        x2d = flat.reshape(rows, cols)
        padded = True
    else:
        rows = n // cols
        x2d = x.reshape(rows, cols)
        padded = False

    # Row-tile sized to ~_TARGET_BLOCK_BYTES, sublane-aligned for the dtype.
    # Remainder blocks are handled by the cdiv grid (masked boundary writes).
    tr = (_TARGET_BLOCK_BYTES // (cols * itemsize)) // sublane * sublane
    tr = max(sublane, tr)
    tile_rows = rows if tr >= rows else tr
    grid = (pl.cdiv(rows, tile_rows),)

    y2d = pl.pallas_call(
        _copy_kernel,
        out_shape=jax.ShapeDtypeStruct((rows, cols), x.dtype),
        grid=grid,
        in_specs=[pl.BlockSpec((tile_rows, cols), lambda i: (i, 0))],
        out_specs=pl.BlockSpec((tile_rows, cols), lambda i: (i, 0)),
        compiler_params=pltpu.CompilerParams(
            dimension_semantics=("parallel",),
            vmem_limit_bytes=_VMEM_LIMIT_BYTES,
        ),
    )(x2d)

    if padded:
        return y2d.reshape(-1)[:n].reshape(orig_shape)
    return y2d.reshape(orig_shape)


if __name__ == "__main__":
    key = jax.random.PRNGKey(0)
    # Small NCHW input consistent with a conv-style module: batch=2, C=4, 16x16.
    x = jax.random.normal(key, (2, 4, 16, 16), dtype=jnp.float32)

    y = transfer_forward(x)
    jax.block_until_ready(y)
    assert y.shape == x.shape and y.dtype == x.dtype
    assert bool(jnp.all(y == x))

    # Awkward (non-128-divisible) shape exercises the padded fallback path.
    x2 = jax.random.normal(jax.random.PRNGKey(1), (3, 5, 7), dtype=jnp.float32)
    y2 = transfer_forward(x2)
    jax.block_until_ready(y2)
    assert y2.shape == x2.shape and y2.dtype == x2.dtype
    assert bool(jnp.all(y2 == x2))

    print("KERNEL_OK")
</pallas_src>

<mosaic_0001>
module attributes {stable_mosaic.version = 11 : i64} {
  func.func @_copy_kernel(%arg0: i32, %arg1: memref<1x2048xf32, #tpu.memory_space<vmem>>, %arg2: memref<1x2048xf32, #tpu.memory_space<vmem>>) attributes {dimension_semantics = [#tpu.dimension_semantics<parallel>], iteration_bounds = array<i64: 1>, scalar_prefetch = 0 : i64, scratch_operands = 0 : i64, tpu.core_type = #tpu.core_type<tc>, window_params = [{transform_indices = @transform_0, window_bounds = array<i64: 1, 2048>}, {transform_indices = @transform_1, window_bounds = array<i64: 1, 2048>}]} {
    %c0 = arith.constant 0 : index
    %c0_0 = arith.constant 0 : index
    %0 = vector.load %arg1[%c0, %c0_0] : memref<1x2048xf32, #tpu.memory_space<vmem>>, vector<1x2048xf32>
    %c0_1 = arith.constant 0 : index
    %c0_2 = arith.constant 0 : index
    %1 = vector.load %arg2[%c0_1, %c0_2] : memref<1x2048xf32, #tpu.memory_space<vmem>>, vector<1x2048xf32>
    tpu.vector_store %arg2[%c0_1, %c0_2], %0 {strides = array<i32>} : memref<1x2048xf32, #tpu.memory_space<vmem>>, vector<1x2048xf32>,
    return
  }
  func.func @transform_0(%arg0: i32) -> (i32, i32) {
    %c0_i32 = arith.constant 0 : i32
    %c0_i32_0 = arith.constant 0 : i32
    return %arg0, %c0_i32 : i32, i32
  }
  func.func @transform_1(%arg0: i32) -> (i32, i32) {
    %c0_i32 = arith.constant 0 : i32
    %c0_i32_0 = arith.constant 0 : i32
    return %arg0, %c0_i32 : i32, i32
  }
}

</mosaic_0001>

<llo_original>
// kernel: tpu_custom_call.1
$region0: #{tpu_custom_call.1}
  #allocation0 [shape = 'u32[]', space=smem, size = 0x4, offset = 0x4, fixed_abs, tag = 'smem constant byte address 0x4 - core index']
  #allocation1 [shape = 'u32[144,128]{1,0:T(1,128)}', space=vmem, size = 0x12000, scoped, tag = 'internal scratch']
  %s0 = inlined_call_operand.hbm [shape: f32[1,2048], index: 0, kind: input, shape index: {}]
  %s1 = inlined_call_operand.hbm [shape: f32[1,2048], index: 1, kind: output, shape index: {}]
  %s2 = sld [smem:[#allocation0]]
  $region18: #{tpu_custom_call.1} parent=0
    _
  %s4 = ssub.s32 1, %s2
  %s5 = scalar_select 0, %s4, %s2
  $region1: #{tpu_custom_call.1} parent=0
    #allocation2 [shape = 'u8[8192]{0}', space=vmem, size = 0x2000, scoped, tag = 'input window, operand 0, single buffered']
    #allocation3 [shape = 's32[1]{0}', space=sflag, size = 0x4, scoped, tag = 'scoped memory for tpu_custom_call.1']
    #allocation4 [shape = 's32[1]{0}', space=sflag, size = 0x4, scoped, tag = 'scoped memory for tpu_custom_call.1']
    #allocation5 [shape = 'u8[8192]{0}', space=vmem, size = 0x2000, scoped, tag = 'output window, operand 0, single buffered']
    %6 = vsyncpa [#allocation3], 0
    %7 = vsyncpa [#allocation4], 0
    // Predicated region
    $region2: #{tpu_custom_call.1} parent=1 // pred_check
      _
    $region3: #{tpu_custom_call.1} parent=1 // pred_check_branch
      %9 = sbr.rel (0) target = $region5
    $region4: #{tpu_custom_call.1} parent=1 // pred_region
      %s11 = ssub.s32 256, 256
      %12 = vsyncadd [#allocation3], %s11
      %s14 = sshll.u32 [#allocation2], 4
      %s15 = int_to_ptr.vmem [resolvable:$true] %s14
      %17 = dma.hbm_to_vmem [thread:$0]  %s0, 256, %s15, [#allocation3]
    $region5: #{tpu_custom_call.1} parent=1 // pred_fallthru
      _
    // Predicated region
    $region6: #{tpu_custom_call.1} parent=1 // pred_check
      _
    $region7: #{tpu_custom_call.1} parent=1 // pred_check_branch
      %19 = sbr.rel (0) target = $region9
    $region8: #{tpu_custom_call.1} parent=1 // pred_region
      %20 = dma.done [#allocation3], 256
    $region9: #{tpu_custom_call.1} parent=1 // pred_fallthru
      _
    %v21 = vld [vmem:[#allocation2] sm:$0xff]
    %v22 = vld [vmem:[#allocation2 + $0x8] sm:$0xff]
    %23 = vst [vmem:[#allocation5] sm:$0xff] %v21
    %24 = vst [vmem:[#allocation5 + $0x8] sm:$0xff] %v22
    // Predicated region
    $region10: #{tpu_custom_call.1} parent=1 // pred_check
      _
    $region11: #{tpu_custom_call.1} parent=1 // pred_check_branch
      %26 = sbr.rel (0) target = $region13
    $region12: #{tpu_custom_call.1} parent=1 // pred_region
      %s28 = ssub.s32 256, 256
      %29 = vsyncadd [#allocation4], %s28
      %s31 = sshll.u32 [#allocation5], 4
      %s32 = int_to_ptr.vmem [resolvable:$true] %s31
      %34 = dma.vmem_to_hbm [thread:$0]  %s32, 256, %s1, [#allocation4]
    $region13: #{tpu_custom_call.1} parent=1 // pred_fallthru
      _
    // Predicated region
    $region14: #{tpu_custom_call.1} parent=1 // pred_check
      _
    $region15: #{tpu_custom_call.1} parent=1 // pred_check_branch
      %36 = sbr.rel (0) target = $region17
    $region16: #{tpu_custom_call.1} parent=1 // pred_region
      %37 = dma.done [#allocation4], 256
    $region17: #{tpu_custom_call.1} parent=1 // pred_fallthru
      _
    %38 = vsyncpa [#allocation3], 1
    %39 = vsyncpa [#allocation4], 1

</llo_original>
